<compile_context>
chip_gen: v7x
topology: tpu7x:2x2x1
jax: 0.10.0
libtpu: 0.0.40
codegen_flags: <defaults>
</compile_context>

<pallas_src>
import functools

import jax
import jax.numpy as jnp
from jax import lax
from jax.experimental import pallas as pl
from jax.experimental.pallas import tpu as pltpu


def _round_up(x: int, m: int) -> int:
    return (x + m - 1) // m * m


def _linear_kernel(x_ref, w_ref, b_ref, o_ref, acc_ref):
    # x_ref: (tm, tk)   w_ref: (tn, tk)   b_ref: (1, tn)
    # o_ref: (tm, tn)   acc_ref: (tm, tn) f32 scratch, resident across K.
    k = pl.program_id(2)

    @pl.when(k == 0)
    def _init():
        acc_ref[...] = jnp.zeros_like(acc_ref)

    # Contract over the minor (features) dim of both tiles: X @ W^T.
    acc_ref[...] += lax.dot_general(
        x_ref[...],
        w_ref[...],
        dimension_numbers=(((1,), (1,)), ((), ())),
        preferred_element_type=jnp.float32,
    )

    @pl.when(k == pl.num_programs(2) - 1)
    def _finalize():
        # Bias added once, in the finalize branch (not per K-step).
        o_ref[...] = (acc_ref[...] + b_ref[...].astype(jnp.float32)).astype(
            o_ref.dtype
        )


@functools.partial(
    jax.jit, static_argnames=("tm", "tn", "tk", "compute_dtype")
)
def base_torch_model_forward(
    x, weight, bias, *, tm=256, tn=256, tk=512, compute_dtype=None
):
    """Pallas equivalent of BaseTorchModel.linear(X).

    x:      (B, input_size)
    weight: (output_size, input_size)   (PyTorch Linear layout, NOT transposed)
    bias:   (output_size,)
    returns (B, output_size)
    """
    B, D = x.shape
    O = weight.shape[0]
    out_dtype = x.dtype

    if compute_dtype is not None:
        x = x.astype(compute_dtype)
        weight = weight.astype(compute_dtype)

    # Clamp tiles to the padded full extents (keeps (8, 128) alignment and
    # avoids silly over-padding at small shapes).
    tm = min(tm, _round_up(B, 8))      # sublane dim of x / out tiles
    tn = min(tn, _round_up(O, 128))    # lane dim of out tile -> lane-dense
    tk = min(tk, _round_up(D, 128))    # lane dim of x / weight tiles

    Bp = _round_up(B, tm)
    Op = _round_up(O, tn)
    Dp = _round_up(D, tk)

    # Zero-pad to tile multiples (zeros contribute nothing to the matmul;
    # padded output columns/rows are sliced off below).  For aligned
    # production shapes these pads are no-ops.
    if (Bp, Dp) != (B, D):
        x = jnp.pad(x, ((0, Bp - B), (0, Dp - D)))
    if (Op, Dp) != (O, D):
        weight = jnp.pad(weight, ((0, Op - O), (0, Dp - D)))
    if Op != O:
        bias = jnp.pad(bias, (0, Op - O))
    b2d = bias.reshape(1, Op)

    grid = (Bp // tm, Op // tn, Dp // tk)

    bytes_per = jnp.dtype(x.dtype).itemsize
    cost = pl.CostEstimate(
        flops=2 * Bp * Dp * Op,
        transcendentals=0,
        bytes_accessed=(
            Bp * Dp * bytes_per
            + Op * Dp * bytes_per
            + Op * jnp.dtype(bias.dtype).itemsize
            + Bp * Op * jnp.dtype(out_dtype).itemsize
        ),
    )

    out_padded = pl.pallas_call(
        _linear_kernel,
        out_shape=jax.ShapeDtypeStruct((Bp, Op), out_dtype),
        grid_spec=pltpu.PrefetchScalarGridSpec(
            num_scalar_prefetch=0,
            grid=grid,
            in_specs=[
                pl.BlockSpec((tm, tk), lambda i, j, k: (i, k)),  # X tile
                pl.BlockSpec((tn, tk), lambda i, j, k: (j, k)),  # W tile (O,D)
                pl.BlockSpec((1, tn), lambda i, j, k: (0, j)),   # bias tile
            ],
            out_specs=pl.BlockSpec((tm, tn), lambda i, j, k: (i, j)),
            scratch_shapes=[pltpu.VMEM((tm, tn), jnp.float32)],
        ),
        compiler_params=pltpu.CompilerParams(
            dimension_semantics=("parallel", "parallel", "arbitrary"),
            vmem_limit_bytes=48 * 1024 * 1024,
        ),
        cost_estimate=cost,
    )(x, weight, b2d)

    return out_padded[:B, :O]


if __name__ == "__main__":
    key = jax.random.PRNGKey(0)

    # ---- Test 1: the literal module shape (input_size=32, output_size=1) ----
    # (At this size a standalone Pallas kernel can't beat fused XLA; it is
    # kept here purely as the correctness/spec shape.)
    input_size, output_size, batch = 32, 1, 8
    kx, kw, kb, key = *jax.random.split(key, 3), jax.random.fold_in(key, 1)
    bound = 1.0 / (input_size ** 0.5)
    weight = jax.random.uniform(
        kw, (output_size, input_size), jnp.float32, -bound, bound
    )
    bias = jax.random.uniform(kb, (output_size,), jnp.float32, -bound, bound)
    x = jax.random.normal(kx, (batch, input_size), jnp.float32)

    out = base_torch_model_forward(x, weight, bias)
    jax.block_until_ready(out)
    ref = x @ weight.T + bias
    assert out.shape == (batch, output_size)
    assert jnp.allclose(out, ref, atol=1e-5, rtol=1e-5)

    # ---- Test 2: multi-tile grid (exercises K-reduction + bias finalize) ----
    B2, D2, O2 = 256, 384, 256
    k1, k2, k3 = jax.random.split(key, 3)
    x2 = jax.random.normal(k1, (B2, D2), jnp.float32)
    w2 = jax.random.normal(k2, (O2, D2), jnp.float32) * 0.05
    b2 = jax.random.normal(k3, (O2,), jnp.float32)

    out2 = base_torch_model_forward(x2, w2, b2, tm=128, tn=128, tk=128)
    jax.block_until_ready(out2)
    ref2 = x2 @ w2.T + b2
    assert out2.shape == (B2, O2)
    assert jnp.allclose(out2, ref2, atol=1e-3, rtol=1e-3)

    # ---- Test 3: bf16 inputs / f32 accumulation path (v6e/v7x MXU path) ----
    out3 = base_torch_model_forward(
        x2, w2, b2, tm=128, tn=128, tk=128, compute_dtype=jnp.bfloat16
    )
    jax.block_until_ready(out3)
    assert jnp.allclose(out3, ref2, atol=5e-1, rtol=5e-2)

    print("KERNEL_OK")
</pallas_src>

<mosaic_0001>
module attributes {stable_mosaic.version = 11 : i64} {
  func.func @_linear_kernel(%arg0: i32, %arg1: i32, %arg2: i32, %arg3: memref<8x128xf32, #tpu.memory_space<vmem>>, %arg4: memref<128x128xf32, #tpu.memory_space<vmem>>, %arg5: memref<1x128xf32, #tpu.memory_space<vmem>>, %arg6: memref<8x128xf32, #tpu.memory_space<vmem>>, %arg7: memref<8x128xf32, #tpu.memory_space<vmem>>) attributes {dimension_semantics = [#tpu.dimension_semantics<parallel>, #tpu.dimension_semantics<parallel>, #tpu.dimension_semantics<arbitrary>], iteration_bounds = array<i64: 1, 1, 1>, scalar_prefetch = 0 : i64, scratch_operands = 1 : i64, tpu.core_type = #tpu.core_type<tc>, window_params = [{transform_indices = @transform_0, window_bounds = array<i64: 8, 128>}, {transform_indices = @transform_1, window_bounds = array<i64: 128, 128>}, {transform_indices = @transform_2, window_bounds = array<i64: 1, 128>}, {transform_indices = @transform_3, window_bounds = array<i64: 8, 128>}]} {
    %c0_i32 = arith.constant 0 : i32
    %0 = arith.cmpi eq, %arg2, %c0_i32 : i32
    %1 = arith.extui %0 : i1 to i32
    %c0_i32_0 = arith.constant 0 : i32
    %2 = arith.cmpi ne, %1, %c0_i32_0 : i32
    scf.if %2 {
      %cst_10 = arith.constant 0.000000e+00 : f32
      %12 = vector.broadcast %cst_10 : f32 to vector<8x128xf32>
      %c0_11 = arith.constant 0 : index
      %c0_12 = arith.constant 0 : index
      %13 = vector.load %arg7[%c0_11, %c0_12] : memref<8x128xf32, #tpu.memory_space<vmem>>, vector<8x128xf32>
      tpu.vector_store %arg7[%c0_11, %c0_12], %12 {strides = array<i32>} : memref<8x128xf32, #tpu.memory_space<vmem>>, vector<8x128xf32>,
    } else {
    }
    %c0 = arith.constant 0 : index
    %c0_1 = arith.constant 0 : index
    %3 = vector.load %arg7[%c0, %c0_1] : memref<8x128xf32, #tpu.memory_space<vmem>>, vector<8x128xf32>
    %c0_2 = arith.constant 0 : index
    %c0_3 = arith.constant 0 : index
    %4 = vector.load %arg3[%c0_2, %c0_3] : memref<8x128xf32, #tpu.memory_space<vmem>>, vector<8x128xf32>
    %c0_4 = arith.constant 0 : index
    %c0_5 = arith.constant 0 : index
    %5 = vector.load %arg4[%c0_4, %c0_5] : memref<128x128xf32, #tpu.memory_space<vmem>>, vector<128x128xf32>
    %cst = arith.constant dense<0.000000e+00> : vector<8x128xf32>
    %6 = tpu.matmul %4, %5, %cst {dimension_numbers = #tpu.dot_dimension_numbers<[1], [1], [0], [0], [0, 0, 1, 0], [], []>} : vector<8x128xf32>, vector<128x128xf32>, vector<8x128xf32> -> vector<8x128xf32>
    %7 = arith.addf %3, %6 : vector<8x128xf32>
    %c0_6 = arith.constant 0 : index
    %c0_7 = arith.constant 0 : index
    %8 = vector.load %arg7[%c0_6, %c0_7] : memref<8x128xf32, #tpu.memory_space<vmem>>, vector<8x128xf32>
    tpu.vector_store %arg7[%c0_6, %c0_7], %7 {strides = array<i32>} : memref<8x128xf32, #tpu.memory_space<vmem>>, vector<8x128xf32>,
    %c0_i32_8 = arith.constant 0 : i32
    %9 = arith.cmpi eq, %arg2, %c0_i32_8 : i32
    %10 = arith.extui %9 : i1 to i32
    %c0_i32_9 = arith.constant 0 : i32
    %11 = arith.cmpi ne, %10, %c0_i32_9 : i32
    scf.if %11 {
      %c0_10 = arith.constant 0 : index
      %c0_11 = arith.constant 0 : index
      %12 = vector.load %arg7[%c0_10, %c0_11] : memref<8x128xf32, #tpu.memory_space<vmem>>, vector<8x128xf32>
      %c0_12 = arith.constant 0 : index
      %c0_13 = arith.constant 0 : index
      %13 = vector.load %arg5[%c0_12, %c0_13] : memref<1x128xf32, #tpu.memory_space<vmem>>, vector<1x128xf32>
      %14 = vector.broadcast %13 : vector<1x128xf32> to vector<8x128xf32>
      %15 = arith.addf %12, %14 : vector<8x128xf32>
      %c0_14 = arith.constant 0 : index
      %c0_15 = arith.constant 0 : index
      %16 = vector.load %arg6[%c0_14, %c0_15] : memref<8x128xf32, #tpu.memory_space<vmem>>, vector<8x128xf32>
      tpu.vector_store %arg6[%c0_14, %c0_15], %15 {strides = array<i32>} : memref<8x128xf32, #tpu.memory_space<vmem>>, vector<8x128xf32>,
    } else {
    }
    return
  }
  func.func @transform_0(%arg0: i32, %arg1: i32, %arg2: i32) -> (i32, i32) {
    %c0_i32 = arith.constant 0 : i32
    return %arg0, %arg2 : i32, i32
  }
  func.func @transform_1(%arg0: i32, %arg1: i32, %arg2: i32) -> (i32, i32) {
    %c0_i32 = arith.constant 0 : i32
    return %arg1, %arg2 : i32, i32
  }
  func.func @transform_2(%arg0: i32, %arg1: i32, %arg2: i32) -> (i32, i32) {
    %c0_i32 = arith.constant 0 : i32
    %c0_i32_0 = arith.constant 0 : i32
    return %c0_i32, %arg1 : i32, i32
  }
  func.func @transform_3(%arg0: i32, %arg1: i32, %arg2: i32) -> (i32, i32) {
    %c0_i32 = arith.constant 0 : i32
    return %arg0, %arg1 : i32, i32
  }
}

</mosaic_0001>

<llo_original>
// kernel: base_torch_model_forward.1
$region0: #{base_torch_model_forward.1}
  #allocation0 [shape = 'u32[]', space=smem, size = 0x4, offset = 0x4, fixed_abs, tag = 'smem constant byte address 0x4 - core index']
  #allocation1 [shape = 'u32[144,128]{1,0:T(1,128)}', space=vmem, size = 0x12000, scoped, tag = 'internal scratch']
  #allocation2 [shape = 'f32[8,128]{1,0:T(8,128)}', space=vmem, size = 0x1000, scoped, tag = 'scratch operand']
  %s0 = inlined_call_operand.vmem [shape: f32[8,128], index: 0, kind: input, shape index: {}]
  %s1 = inlined_call_operand.vmem [shape: f32[128,128], index: 1, kind: input, shape index: {}]
  %s2 = inlined_call_operand.vmem [shape: f32[1,128], index: 2, kind: input, shape index: {}]
  %s3 = inlined_call_operand.vmem [shape: f32[8,128], index: 3, kind: output, shape index: {}]
  %s4 = sld [smem:[#allocation0]]
  $region30: #{base_torch_model_forward.1} parent=0
    _
  %s6 = ssub.s32 1, %s4
  %s7 = scalar_select 0, %s6, %s4
  // Predicated region
  $region2: #{base_torch_model_forward.1} parent=0 // pred_check
    _
  $region3: #{base_torch_model_forward.1} parent=0 // pred_check_branch
    %9 = sbr.rel (0) target = $region5
  $region4: #{base_torch_model_forward.1} parent=0 // pred_region
    _
  $region5: #{base_torch_model_forward.1} parent=0 // pred_fallthru
    _
  // Predicated region
  $region6: #{base_torch_model_forward.1} parent=0 // pred_check
    _
  $region7: #{base_torch_model_forward.1} parent=0 // pred_check_branch
    %11 = sbr.rel (0) target = $region9
  $region8: #{base_torch_model_forward.1} parent=0 // pred_region
    _
  $region9: #{base_torch_model_forward.1} parent=0 // pred_fallthru
    _
  // Predicated region
  $region10: #{base_torch_model_forward.1} parent=0 // pred_check
    _
  $region11: #{base_torch_model_forward.1} parent=0 // pred_check_branch
    %13 = sbr.rel (0) target = $region13
  $region12: #{base_torch_model_forward.1} parent=0 // pred_region
    _
  $region13: #{base_torch_model_forward.1} parent=0 // pred_fallthru
    _
  %p14 = scmp.eq.s32.totalorder 0, 0
  // Predicated region
  $region14: #{base_torch_model_forward.1} parent=0 // pred_check
    %p15 = pneg %p14
  $region15: #{base_torch_model_forward.1} parent=0 // pred_check_branch
    %17 = sbr.rel (%p15) target = $region17
  $region16: #{base_torch_model_forward.1} parent=0 // pred_region
    %18 = vst [vmem:[#allocation2] sm:$0xff] 0.0
  $region17: #{base_torch_model_forward.1} parent=0 // pred_fallthru
    _
  %v19 = vld [vmem:[#allocation2] sm:$0xff]
  %v20 = vld [vmem:[%s0] sm:$0xff]
  %v21 = vld [vmem:[%s1] sm:$0xff]
  %v22 = vld [vmem:[%s1 + $0x8] sm:$0xff]
  %v23 = vld [vmem:[%s1 + $0x10] sm:$0xff]
  %v24 = vld [vmem:[%s1 + $0x18] sm:$0xff]
  %v25 = vld [vmem:[%s1 + $0x20] sm:$0xff]
  %v26 = vld [vmem:[%s1 + $0x28] sm:$0xff]
  %v27 = vld [vmem:[%s1 + $0x30] sm:$0xff]
  %v28 = vld [vmem:[%s1 + $0x38] sm:$0xff]
  %v29 = vld [vmem:[%s1 + $0x40] sm:$0xff]
  %v30 = vld [vmem:[%s1 + $0x48] sm:$0xff]
  %v31 = vld [vmem:[%s1 + $0x50] sm:$0xff]
  %v32 = vld [vmem:[%s1 + $0x58] sm:$0xff]
  %v33 = vld [vmem:[%s1 + $0x60] sm:$0xff]
  %v34 = vld [vmem:[%s1 + $0x68] sm:$0xff]
  %v35 = vld [vmem:[%s1 + $0x70] sm:$0xff]
  %v36 = vld [vmem:[%s1 + $0x78] sm:$0xff]
  %37 = vmatprep.subr.mxu0 0.0
  %38 = vmatpush1.xpose.msra.mxu0 %v21
  %39 = vmatprep.subr.mxu0 0.0
  %40 = vmatpush1.xpose.msra.mxu0 %v22
  %41 = vmatprep.subr.mxu0 0.0
  %42 = vmatpush1.xpose.msra.mxu0 %v23
  %43 = vmatprep.subr.mxu0 0.0
  %44 = vmatpush1.xpose.msra.mxu0 %v24
  %45 = vmatprep.subr.mxu0 0.0
  %46 = vmatpush1.xpose.msra.mxu0 %v25
  %47 = vmatprep.subr.mxu0 0.0
  %48 = vmatpush1.xpose.msra.mxu0 %v26
  %49 = vmatprep.subr.mxu0 0.0
  %50 = vmatpush1.xpose.msra.mxu0 %v27
  %51 = vmatprep.subr.mxu0 0.0
  %52 = vmatpush1.xpose.msra.mxu0 %v28
  %53 = vmatprep.subr.mxu0 0.0
  %54 = vmatpush1.xpose.msra.mxu0 %v29
  %55 = vmatprep.subr.mxu0 0.0
  %56 = vmatpush1.xpose.msra.mxu0 %v30
  %57 = vmatprep.subr.mxu0 0.0
  %58 = vmatpush1.xpose.msra.mxu0 %v31
  %59 = vmatprep.subr.mxu0 0.0
  %60 = vmatpush1.xpose.msra.mxu0 %v32
  %61 = vmatprep.subr.mxu0 0.0
  %62 = vmatpush1.xpose.msra.mxu0 %v33
  %63 = vmatprep.subr.mxu0 0.0
  %64 = vmatpush1.xpose.msra.mxu0 %v34
  %65 = vmatprep.subr.mxu0 0.0
  %66 = vmatpush1.xpose.msra.mxu0 %v35
  %67 = vmatprep.subr.mxu0 0.0
  %68 = vmatpush1.xpose.msra.mxu0 %v36
  %69 = vmatprep.subr.mxu0 0.0
  %70 = vmatpush1.xpose.msra.mxu0 0.0
  %71 = vmatprep.subr.mxu0 0.0
  %72 = vmatpush1.xpose.msra.mxu0 0.0
  %73 = vmatprep.subr.mxu0 0.0
  %74 = vmatpush1.xpose.msra.mxu0 0.0
  %75 = vmatprep.subr.mxu0 0.0
  %76 = vmatpush1.xpose.msra.mxu0 0.0
  %77 = vmatprep.subr.mxu0 0.0
  %78 = vmatpush1.xpose.msra.mxu0 0.0
  %79 = vmatprep.subr.mxu0 0.0
  %80 = vmatpush1.xpose.msra.mxu0 0.0
  %81 = vmatprep.subr.mxu0 0.0
  %82 = vmatpush1.xpose.msra.mxu0 0.0
  %83 = vmatprep.subr.mxu0 0.0
  %84 = vmatpush1.xpose.msra.mxu0 0.0
  %85 = vmatprep.subr.mxu0 0.0
  %86 = vmatpush1.xpose.msra.mxu0 0.0
  %87 = vmatprep.subr.mxu0 0.0
  %88 = vmatpush1.xpose.msra.mxu0 0.0
  %89 = vmatprep.subr.mxu0 0.0
  %90 = vmatpush1.xpose.msra.mxu0 0.0
  %91 = vmatprep.subr.mxu0 0.0
  %92 = vmatpush1.xpose.msra.mxu0 0.0
  %93 = vmatprep.subr.mxu0 0.0
  %94 = vmatpush1.xpose.msra.mxu0 0.0
  %95 = vmatprep.subr.mxu0 0.0
  %96 = vmatpush1.xpose.msra.mxu0 0.0
  %97 = vmatprep.subr.mxu0 0.0
  %98 = vmatpush1.xpose.msra.mxu0 0.0
  %99 = vmatprep.subr.mxu0 0.0
  %100 = vmatpush1.xpose.msra.mxu0 0.0
  %101 = vmatprep.mubr.f32.mxu0 0.0
  %102 = vmatmul.mubr.f32.gmra.mrb[0].mxu0 %v20
  %v103 = vpop.f32.mrb[0].mxu0
  %v104 = vadd.f32 0.0, %v103
  %v105 = vpop.f32.mrb[0].mxu0
  %106 = vdwg.mxu0
  %v107 = vadd.f32 %v19, %v104
  %108 = vst [vmem:[#allocation2] sm:$0xff] %v107
  // Predicated region
  $region18: #{base_torch_model_forward.1} parent=0 // pred_check
    %p109 = pneg %p14
  $region19: #{base_torch_model_forward.1} parent=0 // pred_check_branch
    %111 = sbr.rel (%p109) target = $region21
  $region20: #{base_torch_model_forward.1} parent=0 // pred_region
    %v112 = vld [vmem:[#allocation2] sm:$0xff]
    %v113 = vld [vmem:[%s2] sm:$0x1]
    %v115 = vlaneseq
    %v116 = vshrl.u32 %v115, 7
    %v117 = vsub.s32 0, %v116
    %v118 = vrot.slane %v113, %v117
    %v120 = vadd.f32 %v112, %v118
    %121 = vst [vmem:[%s3] sm:$0xff] %v120
  $region21: #{base_torch_model_forward.1} parent=0 // pred_fallthru
    _
  // Predicated region
  $region22: #{base_torch_model_forward.1} parent=0 // pred_check
    _
  $region23: #{base_torch_model_forward.1} parent=0 // pred_check_branch
    %123 = sbr.rel (0) target = $region25
  $region24: #{base_torch_model_forward.1} parent=0 // pred_region
    _
  $region25: #{base_torch_model_forward.1} parent=0 // pred_fallthru
    _
  // Predicated region
  $region26: #{base_torch_model_forward.1} parent=0 // pred_check
    _
  $region27: #{base_torch_model_forward.1} parent=0 // pred_check_branch
    %125 = sbr.rel (0) target = $region29
  $region28: #{base_torch_model_forward.1} parent=0 // pred_region
    _
  $region29: #{base_torch_model_forward.1} parent=0 // pred_fallthru
    _

</llo_original>
